<compile_context>
chip_gen: v6e
topology: v6e:2x2x1
jax: 0.10.0
libtpu: 0.0.40
codegen_flags: <defaults>
</compile_context>

<pallas_src>
import functools

import numpy as np
import jax
import jax.numpy as jnp
from jax.experimental import pallas as pl
from jax.experimental.pallas import tpu as pltpu


_LANES = 128
_SUBLANES = 8
_BLOCK_BYTES = 2 * 1024 * 1024    # ~2 MiB per block (f32-equivalent) -> ~85%+ of HBM roofline
_VMEM_LIMIT = 32 * 1024 * 1024    # explicit scoped-VMEM limit; safe on v5e/v6e/v7x


def _round_up(v, m):
    return ((v + m - 1) // m) * m


def _pick_row_tile(total_rows, row_bytes_f32):
    """Rows per block: as large as the VMEM budget allows (multiple of 8), but keep
    >= 2 grid steps when possible so both v7x TensorCores get work."""
    tr = max(_SUBLANES,
             (_BLOCK_BYTES // max(row_bytes_f32, 1)) // _SUBLANES * _SUBLANES)
    if tr >= total_rows:
        if total_rows <= _SUBLANES:
            return total_rows                           # one tiny full block
        tr = _round_up(pl.cdiv(total_rows, 2), _SUBLANES)
    return tr


# ----------------------------------------------------------------------------- kernels


def _ln_lanes_kernel(x_ref, w_ref, b_ref, o_ref, *, eps):
    """channels_last, un-packed: normalize each row of a (TR, C) tile over C (lanes)."""
    x = x_ref[...].astype(jnp.float32)
    c = x.shape[-1]
    s1 = jnp.sum(x, axis=-1, keepdims=True)
    s2 = jnp.sum(x * x, axis=-1, keepdims=True)
    mean = s1 * (1.0 / c)
    var = jnp.maximum(s2 * (1.0 / c) - mean * mean, 0.0)
    inv = jax.lax.rsqrt(var + eps)
    w = w_ref[...].astype(jnp.float32)
    b = b_ref[...].astype(jnp.float32)
    o_ref[...] = ((x - mean) * inv * w + b).astype(o_ref.dtype)


def _ln_packed_kernel(x_ref, w_ref, b_ref, o_ref, *, c, eps):
    """channels_last, lane-packed: each row of the (TR, G*C) tile holds G independent
    C-vectors (G*C == 128).  Per-group sums via an XOR-butterfly of lane rotations."""
    x = x_ref[...].astype(jnp.float32)
    gc = x.shape[-1]
    col = jax.lax.broadcasted_iota(jnp.int32, (1, gc), 1)
    s1 = x
    s2 = x * x
    k = c // 2
    while k >= 1:
        # partner(v)[i] == v[i XOR k].  Build it from the two cyclic rotations by
        # +-k; the per-lane select mask comes from a rolled iota, so this is
        # correct regardless of pltpu.roll's direction convention.  (k only
        # touches bits below log2(C), so i XOR k never leaves lane i's group.)
        col_a = pltpu.roll(col, k, axis=1)
        sel_a = jnp.broadcast_to(col_a == (col ^ k), x.shape)
        s1 = s1 + jnp.where(sel_a, pltpu.roll(s1, k, axis=1),
                            pltpu.roll(s1, gc - k, axis=1))
        s2 = s2 + jnp.where(sel_a, pltpu.roll(s2, k, axis=1),
                            pltpu.roll(s2, gc - k, axis=1))
        k //= 2
    mean = s1 * (1.0 / c)
    var = jnp.maximum(s2 * (1.0 / c) - mean * mean, 0.0)
    inv = jax.lax.rsqrt(var + eps)
    w = w_ref[...].astype(jnp.float32)        # weight/bias pre-tiled G times along lanes
    b = b_ref[...].astype(jnp.float32)
    o_ref[...] = ((x - mean) * inv * w + b).astype(o_ref.dtype)


def _ln_sublanes_kernel(x_ref, w_ref, b_ref, o_ref, *, eps):
    """channels_first: (1, C, T) tile, channels on sublanes, spatial on lanes.
    The reduction over C is mostly plain VPU adds (no full cross-lane XLU reduce)."""
    x = x_ref[0].astype(jnp.float32)                    # (C, T)
    c = x.shape[0]
    s1 = jnp.sum(x, axis=0, keepdims=True)              # (1, T)
    s2 = jnp.sum(x * x, axis=0, keepdims=True)
    mean = s1 * (1.0 / c)
    var = jnp.maximum(s2 * (1.0 / c) - mean * mean, 0.0)
    inv = jax.lax.rsqrt(var + eps)
    w = w_ref[...].astype(jnp.float32)                  # (C, 1)
    b = b_ref[...].astype(jnp.float32)
    o_ref[0] = ((x - mean) * inv * w + b).astype(o_ref.dtype)


# ----------------------------------------------------------------------------- wrappers


def _layer_norm_channels_last(x, weight, bias, eps):
    orig_shape = x.shape
    c = orig_shape[-1]
    rows = int(np.prod(orig_shape[:-1]))
    x2 = x.reshape(rows, c)

    g = _LANES // c if (c < _LANES and _LANES % c == 0) else 1
    if g > 1 and rows % g == 0:
        # Free contiguous reshape: pack G rows into the 128-lane axis.
        rp, cp = rows // g, g * c
        x2 = x2.reshape(rp, cp)
        w2 = jnp.tile(weight.reshape(-1), g).reshape(1, cp)
        b2 = jnp.tile(bias.reshape(-1), g).reshape(1, cp)
        kernel = functools.partial(_ln_packed_kernel, c=c, eps=eps)
    else:
        rp, cp = rows, c
        w2 = weight.reshape(1, c)
        b2 = bias.reshape(1, c)
        kernel = functools.partial(_ln_lanes_kernel, eps=eps)

    tr = _pick_row_tile(rp, cp * 4)
    grid = (pl.cdiv(rp, tr),)

    out = pl.pallas_call(
        kernel,
        out_shape=jax.ShapeDtypeStruct((rp, cp), x.dtype),
        grid=grid,
        in_specs=[
            pl.BlockSpec((tr, cp), lambda i: (i, 0)),
            pl.BlockSpec((1, cp), lambda i: (0, 0)),
            pl.BlockSpec((1, cp), lambda i: (0, 0)),
        ],
        out_specs=pl.BlockSpec((tr, cp), lambda i: (i, 0)),
        compiler_params=pltpu.CompilerParams(
            dimension_semantics=("parallel",),
            vmem_limit_bytes=_VMEM_LIMIT,
        ),
    )(x2, w2, b2)
    return out.reshape(orig_shape)


def _layer_norm_channels_first(x, weight, bias, eps):
    orig_shape = x.shape
    n, c = orig_shape[0], orig_shape[1]
    hw = int(np.prod(orig_shape[2:])) if len(orig_shape) > 2 else 1
    x3 = x.reshape(n, c, hw)          # free reshape; channel axis stays second
    w2 = weight.reshape(c, 1)
    b2 = bias.reshape(c, 1)

    # Spatial (lane) tile: multiple of 128 within the VMEM budget, or the full extent.
    t_hw = max(_LANES, (_BLOCK_BYTES // (c * 4)) // _LANES * _LANES)
    if t_hw >= hw:
        t_hw = hw
    grid = (n, pl.cdiv(hw, t_hw))

    out = pl.pallas_call(
        functools.partial(_ln_sublanes_kernel, eps=eps),
        out_shape=jax.ShapeDtypeStruct((n, c, hw), x.dtype),
        grid=grid,
        in_specs=[
            pl.BlockSpec((1, c, t_hw), lambda i, j: (i, 0, j)),
            pl.BlockSpec((c, 1), lambda i, j: (0, 0)),
            pl.BlockSpec((c, 1), lambda i, j: (0, 0)),
        ],
        out_specs=pl.BlockSpec((1, c, t_hw), lambda i, j: (i, 0, j)),
        compiler_params=pltpu.CompilerParams(
            dimension_semantics=("parallel", "parallel"),
            vmem_limit_bytes=_VMEM_LIMIT,
        ),
    )(x3, w2, b2)
    return out.reshape(orig_shape)


def layer_norm_pallas(x, weight, bias, *, eps=1e-6, data_format="channels_last"):
    if data_format == "channels_last":
        return _layer_norm_channels_last(x, weight, bias, eps)
    elif data_format == "channels_first":
        return _layer_norm_channels_first(x, weight, bias, eps)
    raise NotImplementedError(data_format)


# ----------------------------------------------------------------------------- reference


def _layer_norm_ref(x, weight, bias, eps, data_format):
    x32 = x.astype(jnp.float32)
    if data_format == "channels_last":
        u = jnp.mean(x32, axis=-1, keepdims=True)
        s = jnp.mean((x32 - u) ** 2, axis=-1, keepdims=True)
        y = (x32 - u) / jnp.sqrt(s + eps)
        return (y * weight + bias).astype(x.dtype)
    else:  # channels_first, NCHW
        u = jnp.mean(x32, axis=1, keepdims=True)
        s = jnp.mean((x32 - u) ** 2, axis=1, keepdims=True)
        y = (x32 - u) / jnp.sqrt(s + eps)
        return (weight[None, :, None, None] * y
                + bias[None, :, None, None]).astype(x.dtype)


if __name__ == "__main__":
    key = jax.random.PRNGKey(0)
    k1, k2, k3, k4, k5, k6 = jax.random.split(key, 6)
    eps = 1e-6

    # channels_last, C=32 -> lane-packed path (G=4, lane-dense blocks)
    C = 32
    weight = jnp.ones((C,), jnp.float32) + 0.1 * jax.random.normal(k3, (C,), jnp.float32)
    bias = 0.1 * jax.random.normal(k4, (C,), jnp.float32)
    x_cl = jax.random.normal(k1, (2, 8, 8, C), jnp.float32)
    out_cl = jax.block_until_ready(
        layer_norm_pallas(x_cl, weight, bias, eps=eps, data_format="channels_last"))
    ref_cl = _layer_norm_ref(x_cl, weight, bias, eps, "channels_last")
    np.testing.assert_allclose(np.asarray(out_cl), np.asarray(ref_cl), atol=1e-5, rtol=1e-5)

    # channels_first, (N, C, H, W) -> native sublane-reduction path (no transposes)
    x_cf = jax.random.normal(k2, (2, C, 8, 8), jnp.float32)
    out_cf = jax.block_until_ready(
        layer_norm_pallas(x_cf, weight, bias, eps=eps, data_format="channels_first"))
    ref_cf = _layer_norm_ref(x_cf, weight, bias, eps, "channels_first")
    np.testing.assert_allclose(np.asarray(out_cf), np.asarray(ref_cf), atol=1e-5, rtol=1e-5)

    # channels_last, C=96 -> plain lane-reduction path
    C2 = 96
    weight2 = jnp.ones((C2,), jnp.float32) + 0.1 * jax.random.normal(k5, (C2,), jnp.float32)
    bias2 = 0.1 * jax.random.normal(k6, (C2,), jnp.float32)
    x_cl2 = jax.random.normal(k1, (2, 4, 4, C2), jnp.float32)
    out_cl2 = jax.block_until_ready(
        layer_norm_pallas(x_cl2, weight2, bias2, eps=eps, data_format="channels_last"))
    ref_cl2 = _layer_norm_ref(x_cl2, weight2, bias2, eps, "channels_last")
    np.testing.assert_allclose(np.asarray(out_cl2), np.asarray(ref_cl2), atol=1e-5, rtol=1e-5)

    # ragged row count (3*5*7 = 105 rows) -> exercises the masked boundary block (no padding)
    x_cl3 = jax.random.normal(k2, (3, 5, 7, C), jnp.float32)
    out_cl3 = jax.block_until_ready(
        layer_norm_pallas(x_cl3, weight, bias, eps=eps, data_format="channels_last"))
    ref_cl3 = _layer_norm_ref(x_cl3, weight, bias, eps, "channels_last")
    np.testing.assert_allclose(np.asarray(out_cl3), np.asarray(ref_cl3), atol=1e-5, rtol=1e-5)

    print("KERNEL_OK")
</pallas_src>

<mosaic_0001>
module attributes {stable_mosaic.version = 11 : i64} {
  func.func @_ln_packed_kernel(%arg0: i32, %arg1: memref<16x128xf32, #tpu.memory_space<vmem>>, %arg2: memref<1x128xf32, #tpu.memory_space<vmem>>, %arg3: memref<1x128xf32, #tpu.memory_space<vmem>>, %arg4: memref<16x128xf32, #tpu.memory_space<vmem>>) attributes {dimension_semantics = [#tpu.dimension_semantics<parallel>], iteration_bounds = array<i64: 2>, scalar_prefetch = 0 : i64, scratch_operands = 0 : i64, tpu.core_type = #tpu.core_type<tc>, window_params = [{transform_indices = @transform_0, window_bounds = array<i64: 16, 128>}, {pipeline_mode = #tpu.pipeline_mode<synchronous>, transform_indices = @transform_1, window_bounds = array<i64: 1, 128>}, {pipeline_mode = #tpu.pipeline_mode<synchronous>, transform_indices = @transform_2, window_bounds = array<i64: 1, 128>}, {transform_indices = @transform_3, window_bounds = array<i64: 16, 128>}]} {
    %c0 = arith.constant 0 : index
    %c0_0 = arith.constant 0 : index
    %0 = vector.load %arg1[%c0, %c0_0] : memref<16x128xf32, #tpu.memory_space<vmem>>, vector<16x128xf32>
    %1 = tpu.iota {dimensions = array<i32: 1>} : vector<1x128xi32>
    %2 = arith.mulf %0, %0 : vector<16x128xf32>
    %c16_i32 = arith.constant 16 : i32
    %3 = tpu.dynamic_rotate %1 by %c16_i32 dim 1 : vector<1x128xi32>, i32 -> vector<1x128xi32>
    %c16_i32_1 = arith.constant 16 : i32
    %4 = vector.broadcast %c16_i32_1 : i32 to vector<1x128xi32>
    %5 = arith.xori %1, %4 : vector<1x128xi32>
    %6 = arith.cmpi eq, %3, %5 : vector<1x128xi32>
    %7 = vector.shape_cast %6 : vector<1x128xi1> to vector<1x128xi1>
    %8 = vector.broadcast %7 : vector<1x128xi1> to vector<16x128xi1>
    %c16_i32_2 = arith.constant 16 : i32
    %9 = tpu.dynamic_rotate %0 by %c16_i32_2 dim 1 : vector<16x128xf32>, i32 -> vector<16x128xf32>
    %c112_i32 = arith.constant 112 : i32
    %10 = tpu.dynamic_rotate %0 by %c112_i32 dim 1 : vector<16x128xf32>, i32 -> vector<16x128xf32>
    %11 = arith.select %8, %9, %10 : vector<16x128xi1>, vector<16x128xf32>
    %12 = arith.addf %0, %11 : vector<16x128xf32>
    %c16_i32_3 = arith.constant 16 : i32
    %13 = tpu.dynamic_rotate %2 by %c16_i32_3 dim 1 : vector<16x128xf32>, i32 -> vector<16x128xf32>
    %c112_i32_4 = arith.constant 112 : i32
    %14 = tpu.dynamic_rotate %2 by %c112_i32_4 dim 1 : vector<16x128xf32>, i32 -> vector<16x128xf32>
    %15 = arith.select %8, %13, %14 : vector<16x128xi1>, vector<16x128xf32>
    %16 = arith.addf %2, %15 : vector<16x128xf32>
    %c8_i32 = arith.constant 8 : i32
    %17 = tpu.dynamic_rotate %1 by %c8_i32 dim 1 : vector<1x128xi32>, i32 -> vector<1x128xi32>
    %c8_i32_5 = arith.constant 8 : i32
    %18 = vector.broadcast %c8_i32_5 : i32 to vector<1x128xi32>
    %19 = arith.xori %1, %18 : vector<1x128xi32>
    %20 = arith.cmpi eq, %17, %19 : vector<1x128xi32>
    %21 = vector.shape_cast %20 : vector<1x128xi1> to vector<1x128xi1>
    %22 = vector.broadcast %21 : vector<1x128xi1> to vector<16x128xi1>
    %c8_i32_6 = arith.constant 8 : i32
    %23 = tpu.dynamic_rotate %12 by %c8_i32_6 dim 1 : vector<16x128xf32>, i32 -> vector<16x128xf32>
    %c120_i32 = arith.constant 120 : i32
    %24 = tpu.dynamic_rotate %12 by %c120_i32 dim 1 : vector<16x128xf32>, i32 -> vector<16x128xf32>
    %25 = arith.select %22, %23, %24 : vector<16x128xi1>, vector<16x128xf32>
    %26 = arith.addf %12, %25 : vector<16x128xf32>
    %c8_i32_7 = arith.constant 8 : i32
    %27 = tpu.dynamic_rotate %16 by %c8_i32_7 dim 1 : vector<16x128xf32>, i32 -> vector<16x128xf32>
    %c120_i32_8 = arith.constant 120 : i32
    %28 = tpu.dynamic_rotate %16 by %c120_i32_8 dim 1 : vector<16x128xf32>, i32 -> vector<16x128xf32>
    %29 = arith.select %22, %27, %28 : vector<16x128xi1>, vector<16x128xf32>
    %30 = arith.addf %16, %29 : vector<16x128xf32>
    %c4_i32 = arith.constant 4 : i32
    %31 = tpu.dynamic_rotate %1 by %c4_i32 dim 1 : vector<1x128xi32>, i32 -> vector<1x128xi32>
    %c4_i32_9 = arith.constant 4 : i32
    %32 = vector.broadcast %c4_i32_9 : i32 to vector<1x128xi32>
    %33 = arith.xori %1, %32 : vector<1x128xi32>
    %34 = arith.cmpi eq, %31, %33 : vector<1x128xi32>
    %35 = vector.shape_cast %34 : vector<1x128xi1> to vector<1x128xi1>
    %36 = vector.broadcast %35 : vector<1x128xi1> to vector<16x128xi1>
    %c4_i32_10 = arith.constant 4 : i32
    %37 = tpu.dynamic_rotate %26 by %c4_i32_10 dim 1 : vector<16x128xf32>, i32 -> vector<16x128xf32>
    %c124_i32 = arith.constant 124 : i32
    %38 = tpu.dynamic_rotate %26 by %c124_i32 dim 1 : vector<16x128xf32>, i32 -> vector<16x128xf32>
    %39 = arith.select %36, %37, %38 : vector<16x128xi1>, vector<16x128xf32>
    %40 = arith.addf %26, %39 : vector<16x128xf32>
    %c4_i32_11 = arith.constant 4 : i32
    %41 = tpu.dynamic_rotate %30 by %c4_i32_11 dim 1 : vector<16x128xf32>, i32 -> vector<16x128xf32>
    %c124_i32_12 = arith.constant 124 : i32
    %42 = tpu.dynamic_rotate %30 by %c124_i32_12 dim 1 : vector<16x128xf32>, i32 -> vector<16x128xf32>
    %43 = arith.select %36, %41, %42 : vector<16x128xi1>, vector<16x128xf32>
    %44 = arith.addf %30, %43 : vector<16x128xf32>
    %c2_i32 = arith.constant 2 : i32
    %45 = tpu.dynamic_rotate %1 by %c2_i32 dim 1 : vector<1x128xi32>, i32 -> vector<1x128xi32>
    %c2_i32_13 = arith.constant 2 : i32
    %46 = vector.broadcast %c2_i32_13 : i32 to vector<1x128xi32>
    %47 = arith.xori %1, %46 : vector<1x128xi32>
    %48 = arith.cmpi eq, %45, %47 : vector<1x128xi32>
    %49 = vector.shape_cast %48 : vector<1x128xi1> to vector<1x128xi1>
    %50 = vector.broadcast %49 : vector<1x128xi1> to vector<16x128xi1>
    %c2_i32_14 = arith.constant 2 : i32
    %51 = tpu.dynamic_rotate %40 by %c2_i32_14 dim 1 : vector<16x128xf32>, i32 -> vector<16x128xf32>
    %c126_i32 = arith.constant 126 : i32
    %52 = tpu.dynamic_rotate %40 by %c126_i32 dim 1 : vector<16x128xf32>, i32 -> vector<16x128xf32>
    %53 = arith.select %50, %51, %52 : vector<16x128xi1>, vector<16x128xf32>
    %54 = arith.addf %40, %53 : vector<16x128xf32>
    %c2_i32_15 = arith.constant 2 : i32
    %55 = tpu.dynamic_rotate %44 by %c2_i32_15 dim 1 : vector<16x128xf32>, i32 -> vector<16x128xf32>
    %c126_i32_16 = arith.constant 126 : i32
    %56 = tpu.dynamic_rotate %44 by %c126_i32_16 dim 1 : vector<16x128xf32>, i32 -> vector<16x128xf32>
    %57 = arith.select %50, %55, %56 : vector<16x128xi1>, vector<16x128xf32>
    %58 = arith.addf %44, %57 : vector<16x128xf32>
    %c1_i32 = arith.constant 1 : i32
    %59 = tpu.dynamic_rotate %1 by %c1_i32 dim 1 : vector<1x128xi32>, i32 -> vector<1x128xi32>
    %c1_i32_17 = arith.constant 1 : i32
    %60 = vector.broadcast %c1_i32_17 : i32 to vector<1x128xi32>
    %61 = arith.xori %1, %60 : vector<1x128xi32>
    %62 = arith.cmpi eq, %59, %61 : vector<1x128xi32>
    %63 = vector.shape_cast %62 : vector<1x128xi1> to vector<1x128xi1>
    %64 = vector.broadcast %63 : vector<1x128xi1> to vector<16x128xi1>
    %c1_i32_18 = arith.constant 1 : i32
    %65 = tpu.dynamic_rotate %54 by %c1_i32_18 dim 1 : vector<16x128xf32>, i32 -> vector<16x128xf32>
    %c127_i32 = arith.constant 127 : i32
    %66 = tpu.dynamic_rotate %54 by %c127_i32 dim 1 : vector<16x128xf32>, i32 -> vector<16x128xf32>
    %67 = arith.select %64, %65, %66 : vector<16x128xi1>, vector<16x128xf32>
    %68 = arith.addf %54, %67 : vector<16x128xf32>
    %c1_i32_19 = arith.constant 1 : i32
    %69 = tpu.dynamic_rotate %58 by %c1_i32_19 dim 1 : vector<16x128xf32>, i32 -> vector<16x128xf32>
    %c127_i32_20 = arith.constant 127 : i32
    %70 = tpu.dynamic_rotate %58 by %c127_i32_20 dim 1 : vector<16x128xf32>, i32 -> vector<16x128xf32>
    %71 = arith.select %64, %69, %70 : vector<16x128xi1>, vector<16x128xf32>
    %72 = arith.addf %58, %71 : vector<16x128xf32>
    %cst = arith.constant 3.125000e-02 : f32
    %73 = vector.broadcast %cst : f32 to vector<16x128xf32>
    %74 = arith.mulf %68, %73 : vector<16x128xf32>
    %cst_21 = arith.constant 3.125000e-02 : f32
    %75 = vector.broadcast %cst_21 : f32 to vector<16x128xf32>
    %76 = arith.mulf %72, %75 : vector<16x128xf32>
    %77 = arith.mulf %74, %74 : vector<16x128xf32>
    %78 = arith.subf %76, %77 : vector<16x128xf32>
    %cst_22 = arith.constant 0.000000e+00 : f32
    %79 = vector.broadcast %cst_22 : f32 to vector<16x128xf32>
    %80 = arith.maximumf %78, %79 : vector<16x128xf32>
    %cst_23 = arith.constant 9.99999997E-7 : f32
    %81 = vector.broadcast %cst_23 : f32 to vector<16x128xf32>
    %82 = arith.addf %80, %81 : vector<16x128xf32>
    %83 = math.rsqrt %82 : vector<16x128xf32>
    %c0_24 = arith.constant 0 : index
    %c0_25 = arith.constant 0 : index
    %84 = vector.load %arg2[%c0_24, %c0_25] : memref<1x128xf32, #tpu.memory_space<vmem>>, vector<1x128xf32>
    %c0_26 = arith.constant 0 : index
    %c0_27 = arith.constant 0 : index
    %85 = vector.load %arg3[%c0_26, %c0_27] : memref<1x128xf32, #tpu.memory_space<vmem>>, vector<1x128xf32>
    %86 = arith.subf %0, %74 : vector<16x128xf32>
    %87 = arith.mulf %86, %83 : vector<16x128xf32>
    %88 = vector.broadcast %84 : vector<1x128xf32> to vector<16x128xf32>
    %89 = arith.mulf %87, %88 : vector<16x128xf32>
    %90 = vector.broadcast %85 : vector<1x128xf32> to vector<16x128xf32>
    %91 = arith.addf %89, %90 : vector<16x128xf32>
    %c0_28 = arith.constant 0 : index
    %c0_29 = arith.constant 0 : index
    %92 = vector.load %arg4[%c0_28, %c0_29] : memref<16x128xf32, #tpu.memory_space<vmem>>, vector<16x128xf32>
    tpu.vector_store %arg4[%c0_28, %c0_29], %91 {strides = array<i32>} : memref<16x128xf32, #tpu.memory_space<vmem>>, vector<16x128xf32>,
    return
  }
  func.func @transform_0(%arg0: i32) -> (i32, i32) {
    %c0_i32 = arith.constant 0 : i32
    %c0_i32_0 = arith.constant 0 : i32
    return %arg0, %c0_i32 : i32, i32
  }
  func.func @transform_1(%arg0: i32) -> (i32, i32) {
    %c0_i32 = arith.constant 0 : i32
    %c0_i32_0 = arith.constant 0 : i32
    %c0_i32_1 = arith.constant 0 : i32
    return %c0_i32, %c0_i32_0 : i32, i32
  }
  func.func @transform_2(%arg0: i32) -> (i32, i32) {
    %c0_i32 = arith.constant 0 : i32
    %c0_i32_0 = arith.constant 0 : i32
    %c0_i32_1 = arith.constant 0 : i32
    return %c0_i32, %c0_i32_0 : i32, i32
  }
  func.func @transform_3(%arg0: i32) -> (i32, i32) {
    %c0_i32 = arith.constant 0 : i32
    %c0_i32_0 = arith.constant 0 : i32
    return %arg0, %c0_i32 : i32, i32
  }
}

</mosaic_0001>

<llo_original>
// kernel: tpu_custom_call.1
$region0: #{tpu_custom_call.1}
  #allocation0 [shape = 'u32[]', space=smem, size = 0x4, offset = 0x4, fixed_abs, tag = 'smem constant byte address 0x4 - core index']
  #allocation1 [shape = 'u32[144,128]{1,0:T(1,128)}', space=vmem, size = 0x12000, scoped, tag = 'internal scratch']
  %s0 = inlined_call_operand.hbm [shape: f32[32,128], index: 0, kind: input, shape index: {}]
  %s1 = inlined_call_operand.vmem [shape: f32[1,128], index: 1, kind: input, shape index: {}]
  %s2 = inlined_call_operand.vmem [shape: f32[1,128], index: 2, kind: input, shape index: {}]
  %s3 = inlined_call_operand.hbm [shape: f32[32,128], index: 3, kind: output, shape index: {}]
  %s4 = sld [smem:[#allocation0]]
  $region49: #{tpu_custom_call.1} parent=0
    _
  %s6 = ssub.s32 1, %s4
  %s7 = scalar_select 0, %s6, %s4
  $region1: #{tpu_custom_call.1} parent=0
    #allocation2 [shape = 'u8[16384]{0}', space=vmem, size = 0x4000, scoped, tag = 'input window, operand 0']
    #allocation3 [shape = 's32[2]{0}', space=sflag, size = 0x8, scoped, tag = 'scoped memory for tpu_custom_call.1']
    #allocation4 [shape = 's32[2]{0}', space=sflag, size = 0x8, scoped, tag = 'scoped memory for tpu_custom_call.1']
    #allocation5 [shape = 'u8[16384]{0}', space=vmem, size = 0x4000, scoped, tag = 'output window, operand 0']
    %8 = vsyncpa [#allocation3], 0
    %s9 = scalar_lea.sflag [#allocation3], 1
    %10 = vsyncpa %s9, 0
    %11 = vsyncpa [#allocation4], 0
    %s12 = scalar_lea.sflag [#allocation4], 1
    %13 = vsyncpa %s12, 0
    loop: start=0, step=1, limit=4
    $region2: #{tpu_custom_call.1} parent=1 // loop_pre_header
      _
    $region3: #{tpu_custom_call.1} parent=1 // loop_header
      %s15 = sphi 0, %s19
      %p16 = scmp.ge.s32.totalorder %s15, 4
      %s25 = sphi 0, %s27
      %s28 = sphi 0, %s25
      %s29 = sphi 0, %s28
      %s45 = sphi 0, %s29
      %s49 = sphi 0, %s49
      %s51 = sphi 0, %s49
      %s52 = sphi 0, %s51
      %s66 = sphi 0, %s52
      %s70 = sphi 0, %s70
      %s72 = sphi 0, %s70
      %s73 = sphi 0, %s72
      %s87 = sphi 0, %s73
      %s93 = sphi 0, %s95
      %s96 = sphi 0, %s93
      %s97 = sphi 0, %s96
      %s113 = sphi 0, %s97
    $region4: #{tpu_custom_call.1} parent=1 // loop_header_branch
      %18 = sbr.rel (%p16) target = $region8
    $region5: #{tpu_custom_call.1} parent=1 // loop_body
      %s20 = ssub.s32 %s15, 1
      %s21 = ssub.s32 %s15, 2
      %s22 = sadd.s32 %s15, 1
      %s23 = ssub.s32 %s15, %s22
      %p24 = scmp.eq.s32.totalorder %s23, 0
      %s26 = sadd.s32 %s25, 1
      %s27 = scalar_select %p24, %s25, %s26
      %p30 = pneg %p24
      %p31 = scmp.eq.s32.totalorder %s15, 1
      %p32 = por %p30, %p31
      %p33 = scmp.ne.s32.totalorder %s25, %s28
      %p34 = scmp.eq.s32.totalorder %s15, 0
      %p35 = por %p33, %p34
      %p36 = scmp.ne.s32.totalorder %s25, %s28
      %p37 = scmp.eq.s32.totalorder %s20, 1
      %p38 = por %p36, %p37
      %p39 = scmp.ne.s32.totalorder %s28, %s29
      %p40 = scmp.eq.s32.totalorder %s20, 0
      %p41 = por %p39, %p40
      %p42 = scmp.ne.s32.totalorder %s28, %s29
      %p43 = scmp.eq.s32.totalorder %s21, 1
      %p44 = por %p42, %p43
      %p46 = scmp.ne.s32.totalorder %s29, %s45
      %p47 = scmp.eq.s32.totalorder %s21, 0
      %p48 = por %p46, %p47
      %s50 = sadd.s32 %s49, 1
      %p53 = scmp.eq.s32.totalorder %s15, 1
      %p54 = scmp.ne.s32.totalorder %s49, %s51
      %p55 = scmp.eq.s32.totalorder %s15, 0
      %p56 = por %p54, %p55
      %p57 = scmp.ne.s32.totalorder %s49, %s51
      %p58 = scmp.eq.s32.totalorder %s20, 1
      %p59 = por %p57, %p58
      %p60 = scmp.ne.s32.totalorder %s51, %s52
      %p61 = scmp.eq.s32.totalorder %s20, 0
      %p62 = por %p60, %p61
      %p63 = scmp.ne.s32.totalorder %s51, %s52
      %p64 = scmp.eq.s32.totalorder %s21, 1
      %p65 = por %p63, %p64
      %p67 = scmp.ne.s32.totalorder %s52, %s66
      %p68 = scmp.eq.s32.totalorder %s21, 0
      %p69 = por %p67, %p68
      %s71 = sadd.s32 %s70, 1
      %p74 = scmp.eq.s32.totalorder %s15, 1
      %p75 = scmp.ne.s32.totalorder %s70, %s72
      %p76 = scmp.eq.s32.totalorder %s15, 0
      %p77 = por %p75, %p76
      %p78 = scmp.ne.s32.totalorder %s70, %s72
      %p79 = scmp.eq.s32.totalorder %s20, 1
      %p80 = por %p78, %p79
      %p81 = scmp.ne.s32.totalorder %s72, %s73
      %p82 = scmp.eq.s32.totalorder %s20, 0
      %p83 = por %p81, %p82
      %p84 = scmp.ne.s32.totalorder %s72, %s73
      %p85 = scmp.eq.s32.totalorder %s21, 1
      %p86 = por %p84, %p85
      %p88 = scmp.ne.s32.totalorder %s73, %s87
      %p89 = scmp.eq.s32.totalorder %s21, 0
      %p90 = por %p88, %p89
      %s91 = ssub.s32 %s15, %s22
      %p92 = scmp.eq.s32.totalorder %s91, 0
      %s94 = sadd.s32 %s93, 1
      %s95 = scalar_select %p92, %s93, %s94
      %p98 = pneg %p92
      %p99 = scmp.eq.s32.totalorder %s15, 1
      %p100 = por %p98, %p99
      %p101 = scmp.ne.s32.totalorder %s93, %s96
      %p102 = scmp.eq.s32.totalorder %s15, 0
      %p103 = por %p101, %p102
      %p104 = scmp.ne.s32.totalorder %s93, %s96
      %p105 = scmp.eq.s32.totalorder %s20, 1
      %p106 = por %p104, %p105
      %p107 = scmp.ne.s32.totalorder %s96, %s97
      %p108 = scmp.eq.s32.totalorder %s20, 0
      %p109 = por %p107, %p108
      %p110 = scmp.ne.s32.totalorder %s96, %s97
      %p111 = scmp.eq.s32.totalorder %s21, 1
      %p112 = por %p110, %p111
      %p114 = scmp.ne.s32.totalorder %s97, %s113
      %p115 = scmp.eq.s32.totalorder %s21, 0
      %p116 = por %p114, %p115
      %p117 = scmp.le.s32.totalorder 1, %s15
      %p118 = scmp.lt.s32.totalorder %s15, 3
      %p119 = pnand %p117, %p118
      %p120 = pneg %p119
      // Predicated region
      $region9: #{tpu_custom_call.1} parent=5 // pred_check
        _
      $region10: #{tpu_custom_call.1} parent=5 // pred_check_branch
        %122 = sbr.rel (%p119) target = $region12
      $region11: #{tpu_custom_call.1} parent=5 // pred_region
        %s123 = ssub.s32 %s15, 1
        // Predicated region
        $region13: #{tpu_custom_call.1} parent=11 // pred_check
          %p124 = pneg %p62
        $region14: #{tpu_custom_call.1} parent=11 // pred_check_branch
          %126 = sbr.rel (%p124) target = $region16
        $region15: #{tpu_custom_call.1} parent=11 // pred_region
          _
        $region16: #{tpu_custom_call.1} parent=11 // pred_fallthru
          _
        // Predicated region
        $region17: #{tpu_custom_call.1} parent=11 // pred_check
          %p127 = pneg %p83
        $region18: #{tpu_custom_call.1} parent=11 // pred_check_branch
          %129 = sbr.rel (%p127) target = $region20
        $region19: #{tpu_custom_call.1} parent=11 // pred_region
          _
        $region20: #{tpu_custom_call.1} parent=11 // pred_fallthru
          _
      $region12: #{tpu_custom_call.1} parent=5 // pred_fallthru
        _
      %p130 = scmp.lt.s32.totalorder %s15, 2
      // Predicated region
      $region21: #{tpu_custom_call.1} parent=5 // pred_check
        %p131 = pneg %p130
      $region22: #{tpu_custom_call.1} parent=5 // pred_check_branch
        %133 = sbr.rel (%p131) target = $region24
      $region23: #{tpu_custom_call.1} parent=5 // pred_region
        // Predicated region
        $region25: #{tpu_custom_call.1} parent=23 // pred_check
          %p134 = pneg %p35
        $region26: #{tpu_custom_call.1} parent=23 // pred_check_branch
          %136 = sbr.rel (%p134) target = $region28
        $region27: #{tpu_custom_call.1} parent=23 // pred_region
          %s137 = sand.u32 %s25, 1
          %s138 = scalar_lea.sflag [#allocation3], %s137
          %s139 = sand.u32 %s25, 1
          %s140 = smul.addr %s139, 16
          %s141 = scalar_lea.vmem [#allocation2], %s140
          %s142 = smul.u32 2, %s15
          %s144 = ssub.s32 256, 256
          %145 = vsyncadd %s138, %s144
          %s146 = smul.addr %s142, 128
          %s147 = scalar_lea.hbm %s0, %s146
          %s148 = sshll.u32 %s141, 4
          %s149 = int_to_ptr.vmem [resolvable:$true] %s148
          %154 = dma.hbm_to_vmem [thread:$0]  %s147, 256, %s149, %s138, 128, 128, 8
        $region28: #{tpu_custom_call.1} parent=23 // pred_fallthru
          _
      $region24: #{tpu_custom_call.1} parent=5 // pred_fallthru
        _
      %p155 = scmp.le.s32.totalorder 1, %s15
      %p156 = scmp.lt.s32.totalorder %s15, 3
      %p157 = pnand %p155, %p156
      %p158 = pneg %p157
      // Predicated region
      $region29: #{tpu_custom_call.1} parent=5 // pred_check
        _
      $region30: #{tpu_custom_call.1} parent=5 // pred_check_branch
        %160 = sbr.rel (%p157) target = $region32
      $region31: #{tpu_custom_call.1} parent=5 // pred_region
        %s161 = ssub.s32 %s15, 1
        %s162 = sand.u32 %s28, 1
        %s163 = scalar_lea.sflag [#allocation3], %s162
        %s164 = sand.u32 %s28, 1
        %s165 = smul.addr %s164, 16
        %s166 = scalar_lea.vmem [#allocation2], %s165
        // Predicated region
        $region33: #{tpu_custom_call.1} parent=31 // pred_check
          %p167 = pneg %p41
        $region34: #{tpu_custom_call.1} parent=31 // pred_check_branch
          %169 = sbr.rel (%p167) target = $region36
        $region35: #{tpu_custom_call.1} parent=31 // pred_region
          %170 = dma.done %s163, 256
        $region36: #{tpu_custom_call.1} parent=31 // pred_fallthru
          _
        %s171 = sand.u32 %s28, 1
        %s172 = scalar_lea.sflag [#allocation3], %s171
        %s173 = sand.u32 %s28, 1
        %s174 = smul.addr %s173, 16
        %s175 = scalar_lea.vmem [#allocation2], %s174
        %p176 = pneg %p41
        %p177 = pneg %p38
        %p178 = pneg %p62
        %p179 = pneg %p59
        %p180 = pneg %p83
        %p181 = pneg %p80
        %p182 = pneg %p109
        %p183 = pneg %p106
        %s184 = sand.u32 %s96, 1
        %s185 = scalar_lea.sflag [#allocation4], %s184
        %s186 = sand.u32 %s96, 1
        %s187 = smul.addr %s186, 16
        %s188 = scalar_lea.vmem [#allocation5], %s187
        %s189 = smul.u32 2, %s20
        %s190 = smul.u32 2, %s20
        %v191 = vld [vmem:[%s166] sm:$0xff]
        %v192 = vld [vmem:[%s166 + $0x8] sm:$0xff]
        %v193 = vlaneseq
        %v194 = vand.u32 %v193, 127
        %v195 = vmul.f32 %v191, %v191
        %v196 = vmul.f32 %v192, %v192
        %197 = vrot.lane.b32.xlu0 %v194, 16
        %v198 = vpop.permute.xlu0 %197
        %v199 = vxor.u32 %v194, 16
        %vm200 = vcmp.eq.s32.totalorder %v198, %v199
        %v201 = vsel %vm200, 1, 0
        %v202 = vlaneseq
        %v203 = vshrl.u32 %v202, 7
        %v204 = vsub.s32 0, %v203
        %v205 = vrot.slane %v201, %v204
        %vm206 = vcmp.eq.s32.totalorder %v205, 1
        %207 = vrot.lane.b32.xlu0 %v191, 16
        %v208 = vpop.permute.xlu0 %207
        %209 = vrot.lane.b32.xlu0 %v192, 16
        %v210 = vpop.permute.xlu0 %209
        %211 = vrot.lane.b32.xlu0 %v191, 112
        %v212 = vpop.permute.xlu0 %211
        %213 = vrot.lane.b32.xlu0 %v192, 112
        %v214 = vpop.permute.xlu0 %213
        %v215 = vsel %vm206, %v208, %v212
        %v216 = vsel %vm206, %v210, %v214
        %v217 = vadd.f32 %v191, %v215
        %v218 = vadd.f32 %v192, %v216
        %219 = vrot.lane.b32.xlu0 %v195, 16
        %v220 = vpop.permute.xlu0 %219
        %221 = vrot.lane.b32.xlu0 %v196, 16
        %v222 = vpop.permute.xlu0 %221
        %223 = vrot.lane.b32.xlu0 %v195, 112
        %v224 = vpop.permute.xlu0 %223
        %225 = vrot.lane.b32.xlu0 %v196, 112
        %v226 = vpop.permute.xlu0 %225
        %v227 = vsel %vm206, %v220, %v224
        %v228 = vsel %vm206, %v222, %v226
        %v229 = vadd.f32 %v195, %v227
        %v230 = vadd.f32 %v196, %v228
        %231 = vrot.lane.b32.xlu0 %v194, 8
        %v232 = vpop.permute.xlu0 %231
        %v233 = vxor.u32 %v194, 8
        %vm234 = vcmp.eq.s32.totalorder %v232, %v233
        %v235 = vsel %vm234, 1, 0
        %v236 = vlaneseq
        %v237 = vshrl.u32 %v236, 7
        %v238 = vsub.s32 0, %v237
        %v239 = vrot.slane %v235, %v238
        %vm240 = vcmp.eq.s32.totalorder %v239, 1
        %241 = vrot.lane.b32.xlu0 %v217, 8
        %v242 = vpop.permute.xlu0 %241
        %243 = vrot.lane.b32.xlu0 %v218, 8
        %v244 = vpop.permute.xlu0 %243
        %245 = vrot.lane.b32.xlu0 %v217, 120
        %v246 = vpop.permute.xlu0 %245
        %247 = vrot.lane.b32.xlu0 %v218, 120
        %v248 = vpop.permute.xlu0 %247
        %v249 = vsel %vm240, %v242, %v246
        %v250 = vsel %vm240, %v244, %v248
        %v251 = vadd.f32 %v217, %v249
        %v252 = vadd.f32 %v218, %v250
        %253 = vrot.lane.b32.xlu0 %v229, 8
        %v254 = vpop.permute.xlu0 %253
        %255 = vrot.lane.b32.xlu0 %v230, 8
        %v256 = vpop.permute.xlu0 %255
        %257 = vrot.lane.b32.xlu0 %v229, 120
        %v258 = vpop.permute.xlu0 %257
        %259 = vrot.lane.b32.xlu0 %v230, 120
        %v260 = vpop.permute.xlu0 %259
        %v261 = vsel %vm240, %v254, %v258
        %v262 = vsel %vm240, %v256, %v260
        %v263 = vadd.f32 %v229, %v261
        %v264 = vadd.f32 %v230, %v262
        %265 = vrot.lane.b32.xlu0 %v194, 4
        %v266 = vpop.permute.xlu0 %265
        %v267 = vxor.u32 %v194, 4
        %vm268 = vcmp.eq.s32.totalorder %v266, %v267
        %v269 = vsel %vm268, 1, 0
        %v270 = vlaneseq
        %v271 = vshrl.u32 %v270, 7
        %v272 = vsub.s32 0, %v271
        %v273 = vrot.slane %v269, %v272
        %vm274 = vcmp.eq.s32.totalorder %v273, 1
        %275 = vrot.lane.b32.xlu0 %v251, 4
        %v276 = vpop.permute.xlu0 %275
        %277 = vrot.lane.b32.xlu0 %v252, 4
        %v278 = vpop.permute.xlu0 %277
        %279 = vrot.lane.b32.xlu0 %v251, 124
        %v280 = vpop.permute.xlu0 %279
        %281 = vrot.lane.b32.xlu0 %v252, 124
        %v282 = vpop.permute.xlu0 %281
        %v283 = vsel %vm274, %v276, %v280
        %v284 = vsel %vm274, %v278, %v282
        %v285 = vadd.f32 %v251, %v283
        %v286 = vadd.f32 %v252, %v284
        %287 = vrot.lane.b32.xlu0 %v263, 4
        %v288 = vpop.permute.xlu0 %287
        %289 = vrot.lane.b32.xlu0 %v264, 4
        %v290 = vpop.permute.xlu0 %289
        %291 = vrot.lane.b32.xlu0 %v263, 124
        %v292 = vpop.permute.xlu0 %291
        %293 = vrot.lane.b32.xlu0 %v264, 124
        %v294 = vpop.permute.xlu0 %293
        %v295 = vsel %vm274, %v288, %v292
        %v296 = vsel %vm274, %v290, %v294
        %v297 = vadd.f32 %v263, %v295
        %v298 = vadd.f32 %v264, %v296
        %299 = vrot.lane.b32.xlu0 %v194, 2
        %v300 = vpop.permute.xlu0 %299
        %v301 = vxor.u32 %v194, 2
        %vm302 = vcmp.eq.s32.totalorder %v300, %v301
        %v303 = vsel %vm302, 1, 0
        %v304 = vlaneseq
        %v305 = vshrl.u32 %v304, 7
        %v306 = vsub.s32 0, %v305
        %v307 = vrot.slane %v303, %v306
        %vm308 = vcmp.eq.s32.totalorder %v307, 1
        %309 = vrot.lane.b32.xlu0 %v285, 2
        %v310 = vpop.permute.xlu0 %309
        %311 = vrot.lane.b32.xlu0 %v286, 2
        %v312 = vpop.permute.xlu0 %311
        %313 = vrot.lane.b32.xlu0 %v285, 126
        %v314 = vpop.permute.xlu0 %313
        %315 = vrot.lane.b32.xlu0 %v286, 126
        %v316 = vpop.permute.xlu0 %315
        %v317 = vsel %vm308, %v310, %v314
        %v318 = vsel %vm308, %v312, %v316
        %v319 = vadd.f32 %v285, %v317
        %v320 = vadd.f32 %v286, %v318
        %321 = vrot.lane.b32.xlu0 %v297, 2
        %v322 = vpop.permute.xlu0 %321
        %323 = vrot.lane.b32.xlu0 %v298, 2
        %v324 = vpop.permute.xlu0 %323
        %325 = vrot.lane.b32.xlu0 %v297, 126
        %v326 = vpop.permute.xlu0 %325
        %327 = vrot.lane.b32.xlu0 %v298, 126
        %v328 = vpop.permute.xlu0 %327
        %v329 = vsel %vm308, %v322, %v326
        %v330 = vsel %vm308, %v324, %v328
        %v331 = vadd.f32 %v297, %v329
        %v332 = vadd.f32 %v298, %v330
        %333 = vrot.lane.b32.xlu0 %v194, 1
        %v334 = vpop.permute.xlu0 %333
        %v335 = vxor.u32 %v194, 1
        %vm336 = vcmp.eq.s32.totalorder %v334, %v335
        %v337 = vsel %vm336, 1, 0
        %v338 = vlaneseq
        %v339 = vshrl.u32 %v338, 7
        %v340 = vsub.s32 0, %v339
        %v341 = vrot.slane %v337, %v340
        %vm342 = vcmp.eq.s32.totalorder %v341, 1
        %343 = vrot.lane.b32.xlu0 %v319, 1
        %v344 = vpop.permute.xlu0 %343
        %345 = vrot.lane.b32.xlu0 %v320, 1
        %v346 = vpop.permute.xlu0 %345
        %347 = vrot.lane.b32.xlu0 %v319, 127
        %v348 = vpop.permute.xlu0 %347
        %349 = vrot.lane.b32.xlu0 %v320, 127
        %v350 = vpop.permute.xlu0 %349
        %v351 = vsel %vm342, %v344, %v348
        %v352 = vsel %vm342, %v346, %v350
        %v353 = vadd.f32 %v319, %v351
        %v354 = vadd.f32 %v320, %v352
        %355 = vrot.lane.b32.xlu0 %v331, 1
        %v356 = vpop.permute.xlu0 %355
        %357 = vrot.lane.b32.xlu0 %v332, 1
        %v358 = vpop.permute.xlu0 %357
        %359 = vrot.lane.b32.xlu0 %v331, 127
        %v360 = vpop.permute.xlu0 %359
        %361 = vrot.lane.b32.xlu0 %v332, 127
        %v362 = vpop.permute.xlu0 %361
        %v363 = vsel %vm342, %v356, %v360
        %v364 = vsel %vm342, %v358, %v362
        %v365 = vadd.f32 %v331, %v363
        %v366 = vadd.f32 %v332, %v364
        %v367 = vmul.f32 %v353, 0.03125
        %v368 = vmul.f32 %v354, 0.03125
        %v369 = vmul.f32 %v365, 0.03125
        %v370 = vmul.f32 %v366, 0.03125
        %v371 = vmul.f32 %v367, %v367
        %v372 = vmul.f32 %v368, %v368
        %v373 = vsub.f32 %v369, %v371
        %v374 = vsub.f32 %v370, %v372
        %v375 = vmax.f32 %v373, 0.0
        %v376 = vmax.f32 %v374, 0.0
        %v377 = vadd.f32 %v375, 1e-06
        %v378 = vadd.f32 %v376, 1e-06
        %v379 = vrsqrt.pop %v377
        %v380 = vrsqrt.pop %v378
        %v381 = vld [vmem:[%s1] sm:$0x1]
        %v382 = vld [vmem:[%s2] sm:$0x1]
        %v383 = vsub.f32 %v191, %v367
        %v384 = vsub.f32 %v192, %v368
        %v385 = vmul.f32 %v383, %v379
        %v386 = vmul.f32 %v384, %v380
        %v388 = vlaneseq
        %v389 = vshrl.u32 %v388, 7
        %v390 = vsub.s32 0, %v389
        %v391 = vrot.slane %v381, %v390
        %v393 = vmul.f32 %v385, %v391
        %v394 = vmul.f32 %v386, %v391
        %v396 = vlaneseq
        %v397 = vshrl.u32 %v396, 7
        %v398 = vsub.s32 0, %v397
        %v399 = vrot.slane %v382, %v398
        %v401 = vadd.f32 %v393, %v399
        %v402 = vadd.f32 %v394, %v399
        %403 = vst [vmem:[%s188] sm:$0xff] %v401
        %404 = vst [vmem:[%s188 + $0x8] sm:$0xff] %v402
        %s405 = sand.u32 %s96, 1
        %s406 = scalar_lea.sflag [#allocation4], %s405
        %s407 = sand.u32 %s96, 1
        %s408 = smul.addr %s407, 16
        %s409 = scalar_lea.vmem [#allocation5], %s408
        // Predicated region
        $region37: #{tpu_custom_call.1} parent=31 // pred_check
          %p410 = pneg %p106
        $region38: #{tpu_custom_call.1} parent=31 // pred_check_branch
          %412 = sbr.rel (%p410) target = $region40
        $region39: #{tpu_custom_call.1} parent=31 // pred_region
          %s413 = smul.u32 2, %s20
          %s415 = ssub.s32 256, 256
          %416 = vsyncadd %s406, %s415
          %s417 = smul.addr %s413, 128
          %s418 = scalar_lea.hbm %s3, %s417
          %s419 = sshll.u32 %s409, 4
          %s420 = int_to_ptr.vmem [resolvable:$true] %s419
          %425 = dma.vmem_to_hbm [thread:$0]  %s420, 256, %s418, %s406, 128, 128, 8
        $region40: #{tpu_custom_call.1} parent=31 // pred_fallthru
          _
      $region32: #{tpu_custom_call.1} parent=5 // pred_fallthru
        _
      %p426 = scmp.le.s32.totalorder 2, %s15
      // Predicated region
      $region41: #{tpu_custom_call.1} parent=5 // pred_check
        %p427 = pneg %p426
      $region42: #{tpu_custom_call.1} parent=5 // pred_check_branch
        %429 = sbr.rel (%p427) target = $region44
      $region43: #{tpu_custom_call.1} parent=5 // pred_region
        %s430 = ssub.s32 %s15, 2
        // Predicated region
        $region45: #{tpu_custom_call.1} parent=43 // pred_check
          %p431 = pneg %p112
        $region46: #{tpu_custom_call.1} parent=43 // pred_check_branch
          %433 = sbr.rel (%p431) target = $region48
        $region47: #{tpu_custom_call.1} parent=43 // pred_region
          %s434 = sand.u32 %s97, 1
          %s435 = scalar_lea.sflag [#allocation4], %s434
          %s436 = sand.u32 %s97, 1
          %s437 = smul.addr %s436, 16
          %s438 = scalar_lea.vmem [#allocation5], %s437
          %439 = dma.done %s435, 256
        $region48: #{tpu_custom_call.1} parent=43 // pred_fallthru
          _
      $region44: #{tpu_custom_call.1} parent=5 // pred_fallthru
        _
    $region6: #{tpu_custom_call.1} parent=1 // loop_footer
      %s19 = sadd.s32 1, %s15
    $region7: #{tpu_custom_call.1} parent=1 // loop_footer_branch
      %14 = sbr.rel target = $region3
    $region8: #{tpu_custom_call.1} parent=1 // loop_exit
      _
    %440 = vsyncpa [#allocation3], 1
    %s441 = scalar_lea.sflag [#allocation3], 1
    %442 = vsyncpa %s441, 1
    %443 = vsyncpa [#allocation4], 1
    %s444 = scalar_lea.sflag [#allocation4], 1
    %445 = vsyncpa %s444, 1

</llo_original>
